<compile_context>
chip_gen: v5e
topology: v5e:2x2
jax: 0.10.0
libtpu: 0.0.40
codegen_flags: <defaults>
</compile_context>

<pallas_src>
import functools

import jax
import jax.numpy as jnp
from jax.experimental import pallas as pl
from jax.experimental.pallas import tpu as pltpu


# Slab size (bytes) below which the fully fused single-read path is used.
_FUSED_SLAB_LIMIT = 2_500_000  # ~2.4 MiB f32 -> ~10 MiB double-buffered in+out


# ---------------------------------------------------------------------------
# Path A: fully fused kernel (x read from HBM exactly once)
# ---------------------------------------------------------------------------
def _scse_fused_kernel(x_ref, w1t_ref, b1_ref, w2_ref, b2_ref, wsp_ref, o_ref):
    x = x_ref[0]                                             # (C, HW) f32
    # Channel squeeze: AdaptiveAvgPool2d(1) == mean over the spatial (lane) axis.
    pooled = jnp.mean(x, axis=1, keepdims=True)              # (C, 1)
    # fc1 + ReLU: VPU broadcast-multiply + XLU sublane reduce (avoids a (Cr,1) MXU matmul).
    h = jnp.maximum(
        jnp.sum(w1t_ref[...] * pooled, axis=0, keepdims=True) + b1_ref[...],
        0.0)                                                 # (1, Cr)
    # fc2 + sigmoid: VPU broadcast-multiply + XLU lane reduce.
    g = jax.nn.sigmoid(
        jnp.sum(w2_ref[...] * h, axis=1, keepdims=True) + b2_ref[...])  # (C, 1)
    # Spatial SE: 1x1 conv (no bias) over channels -> (1, HW), then sigmoid (M=1 MXU matmul).
    s = jax.nn.sigmoid(
        jnp.dot(wsp_ref[...], x, preferred_element_type=jnp.float32))   # (1, HW)
    # Fused epilogue:  chn_se*x + x*spa_se  ==  x * (g + s)
    o_ref[0] = x * (g + s)


def _fused_path(x_flat, w1, b1, w2, b2, wsp):
    N, C, HW = x_flat.shape
    Cr = w1.shape[0]
    w1t = w1.T                    # (C, Cr)
    b1r = b1.reshape(1, Cr)       # (1, Cr)
    b2c = b2.reshape(C, 1)        # (C, 1)

    cost = pl.CostEstimate(
        flops=5 * N * C * HW,                 # pooling + spatial matmul + epilogue
        transcendentals=N * (HW + C),         # sigmoids
        bytes_accessed=2 * N * C * HW * 4,    # x read once + out written once
    )

    return pl.pallas_call(
        _scse_fused_kernel,
        out_shape=jax.ShapeDtypeStruct((N, C, HW), jnp.float32),
        grid_spec=pltpu.PrefetchScalarGridSpec(
            num_scalar_prefetch=0,
            grid=(N,),
            in_specs=[
                pl.BlockSpec((1, C, HW), lambda n: (n, 0, 0)),  # x slab
                pl.BlockSpec((C, Cr),    lambda n: (0, 0)),     # fc1 weight^T
                pl.BlockSpec((1, Cr),    lambda n: (0, 0)),     # fc1 bias (row)
                pl.BlockSpec((C, Cr),    lambda n: (0, 0)),     # fc2 weight
                pl.BlockSpec((C, 1),     lambda n: (0, 0)),     # fc2 bias (col)
                pl.BlockSpec((1, C),     lambda n: (0, 0)),     # spatial_se weight
            ],
            out_specs=pl.BlockSpec((1, C, HW), lambda n: (n, 0, 0)),
        ),
        compiler_params=pltpu.CompilerParams(dimension_semantics=("parallel",)),
        cost_estimate=cost,
    )(x_flat, w1t, b1r, w2, b2c, wsp)


# ---------------------------------------------------------------------------
# Path B: streaming apply kernel (channel gate precomputed outside)
# ---------------------------------------------------------------------------
def _scse_apply_kernel(x_ref, gate_ref, wsp_ref, o_ref):
    x = x_ref[0]                  # (C, THW)
    gate = gate_ref[0]            # (C, 1)   precomputed channel gate
    s = jax.nn.sigmoid(
        jnp.dot(wsp_ref[...], x, preferred_element_type=jnp.float32))  # (1, THW)
    o_ref[0] = x * (gate + s)


def _choose_hw_tile(hw, c, max_tile_bytes=2 << 20):
    """Lane-dense HW tile: multiple of 128 dividing hw, ~<=2 MiB f32 per tile."""
    if hw % 128 != 0:
        # TODO(synk): ragged spatial extent falls back to a full-extent block
        # (correct; may exceed scoped VMEM for very large ragged images).
        return hw
    max_lanes = max(128, ((max_tile_bytes // (c * 4)) // 128) * 128)
    thw = min(hw, max_lanes)
    while hw % thw != 0:
        thw -= 128
    return thw


def _channel_gate(x_flat, w1, b1, w2, b2):
    """Batched channel-SE gate for all N at once: (N, C)."""
    pooled = jnp.mean(x_flat, axis=-1)                 # (N, C)   AdaptiveAvgPool2d(1)
    h = jnp.maximum(pooled @ w1.T + b1[:, 0], 0.0)     # (N, Cr)  fc1 + ReLU
    return jax.nn.sigmoid(h @ w2.T + b2[:, 0])         # (N, C)   fc2 + sigmoid


def _streaming_path(x_flat, w1, b1, w2, b2, wsp):
    N, C, HW = x_flat.shape

    # Tiny precompute (reads x once in XLA): channel gate for all batch elements.
    gate = _channel_gate(x_flat, w1, b1, w2, b2).reshape(N, C, 1)

    THW = _choose_hw_tile(HW, C)
    n_hw_tiles = HW // THW

    cost = pl.CostEstimate(
        flops=4 * N * C * HW,                 # spatial matmul + fused epilogue
        transcendentals=N * HW,               # sigmoid of spatial gate
        bytes_accessed=2 * N * C * HW * 4,
    )

    return pl.pallas_call(
        _scse_apply_kernel,
        out_shape=jax.ShapeDtypeStruct((N, C, HW), jnp.float32),
        grid_spec=pltpu.PrefetchScalarGridSpec(
            num_scalar_prefetch=0,
            grid=(N, n_hw_tiles),
            in_specs=[
                pl.BlockSpec((1, C, THW), lambda n, t: (n, 0, t)),  # x tile
                pl.BlockSpec((1, C, 1),   lambda n, t: (n, 0, 0)),  # channel gate
                pl.BlockSpec((1, C),      lambda n, t: (0, 0)),     # spatial_se weight
            ],
            out_specs=pl.BlockSpec((1, C, THW), lambda n, t: (n, 0, t)),
        ),
        compiler_params=pltpu.CompilerParams(
            dimension_semantics=("parallel", "parallel")),
        cost_estimate=cost,
    )(x_flat, gate, wsp)


# ---------------------------------------------------------------------------
# Public entry point
# ---------------------------------------------------------------------------
@functools.partial(jax.jit, static_argnames=("force_streaming",))
def scse_forward(x_nchw, params, force_streaming=False):
    """x_nchw: (N, C, H, W) float32. Returns (N, C, H, W) float32 (concat=False)."""
    N, C, H, W = x_nchw.shape
    HW = H * W
    w1, b1, w2, b2, wsp = params
    x_flat = x_nchw.reshape(N, C, HW)

    slab_bytes = C * HW * 4
    if (not force_streaming) and slab_bytes <= _FUSED_SLAB_LIMIT:
        out = _fused_path(x_flat, w1, b1, w2, b2, wsp)
    else:
        out = _streaming_path(x_flat, w1, b1, w2, b2, wsp)
    return out.reshape(N, C, H, W)


# ---------------------------------------------------------------------------
# params / reference
# ---------------------------------------------------------------------------
def init_params(key, channels, reduction=16):
    cr = channels // reduction
    k1, k2, k3, k4, k5 = jax.random.split(key, 5)
    w1 = jax.random.normal(k1, (cr, channels), jnp.float32) * 0.1   # fc1.weight (Cr,C,1,1)
    b1 = jax.random.normal(k2, (cr, 1), jnp.float32) * 0.1          # fc1.bias
    w2 = jax.random.normal(k3, (channels, cr), jnp.float32) * 0.1   # fc2.weight (C,Cr,1,1)
    b2 = jax.random.normal(k4, (channels, 1), jnp.float32) * 0.1    # fc2.bias
    wsp = jax.random.normal(k5, (1, channels), jnp.float32) * 0.1   # spatial_se weight, bias=False
    return w1, b1, w2, b2, wsp


def reference_forward(x, params):
    """Pure-JAX reference mirroring the PyTorch forward (concat=False)."""
    w1, b1, w2, b2, wsp = params
    pooled = jnp.mean(x, axis=(2, 3))                        # (N, C)
    h = jnp.maximum(pooled @ w1.T + b1[:, 0], 0.0)           # (N, Cr)
    gate = jax.nn.sigmoid(h @ w2.T + b2[:, 0])               # (N, C)
    chn_se = gate[:, :, None, None] * x
    s = jax.nn.sigmoid(jnp.einsum("oc,nchw->nohw", wsp, x))  # (N, 1, H, W)
    spa_se = x * s
    return chn_se + spa_se


if __name__ == "__main__":
    # channels must be >= reduction so that channels // reduction >= 1
    N, C, H, W = 2, 32, 16, 16
    key = jax.random.PRNGKey(0)
    kx, kp = jax.random.split(key)
    x = jax.random.normal(kx, (N, C, H, W), jnp.float32)
    params = init_params(kp, C, reduction=16)

    ref = reference_forward(x, params)

    # Fused single-read path (default at this size).
    out_fused = jax.block_until_ready(scse_forward(x, params))
    assert out_fused.shape == (N, C, H, W)
    assert jnp.allclose(out_fused, ref, atol=1e-5, rtol=1e-5), "fused path mismatch"

    # Streaming path (used for large feature maps) validated on the same data.
    out_stream = jax.block_until_ready(scse_forward(x, params, force_streaming=True))
    assert jnp.allclose(out_stream, ref, atol=1e-5, rtol=1e-5), "streaming path mismatch"

    print("KERNEL_OK")
</pallas_src>

<mosaic_0001>
module attributes {stable_mosaic.version = 11 : i64} {
  func.func @_scse_fused_kernel(%arg0: i32, %arg1: memref<1x32x256xf32, #tpu.memory_space<vmem>>, %arg2: memref<32x2xf32, #tpu.memory_space<vmem>>, %arg3: memref<1x2xf32, #tpu.memory_space<vmem>>, %arg4: memref<32x2xf32, #tpu.memory_space<vmem>>, %arg5: memref<32x1xf32, #tpu.memory_space<vmem>>, %arg6: memref<1x32xf32, #tpu.memory_space<vmem>>, %arg7: memref<1x32x256xf32, #tpu.memory_space<vmem>>) attributes {dimension_semantics = [#tpu.dimension_semantics<parallel>], iteration_bounds = array<i64: 2>, scalar_prefetch = 0 : i64, scratch_operands = 0 : i64, tpu.core_type = #tpu.core_type<tc>, window_params = [{transform_indices = @transform_0, window_bounds = array<i64: 1, 32, 256>}, {pipeline_mode = #tpu.pipeline_mode<synchronous>, transform_indices = @transform_1, window_bounds = array<i64: 32, 2>}, {pipeline_mode = #tpu.pipeline_mode<synchronous>, transform_indices = @transform_2, window_bounds = array<i64: 1, 2>}, {pipeline_mode = #tpu.pipeline_mode<synchronous>, transform_indices = @transform_3, window_bounds = array<i64: 32, 2>}, {pipeline_mode = #tpu.pipeline_mode<synchronous>, transform_indices = @transform_4, window_bounds = array<i64: 32, 1>}, {pipeline_mode = #tpu.pipeline_mode<synchronous>, transform_indices = @transform_5, window_bounds = array<i64: 1, 32>}, {transform_indices = @transform_6, window_bounds = array<i64: 1, 32, 256>}]} {
    %c0 = arith.constant 0 : index
    %c0_0 = arith.constant 0 : index
    %c0_1 = arith.constant 0 : index
    %0 = vector.load %arg1[%c0, %c0_0, %c0_1] : memref<1x32x256xf32, #tpu.memory_space<vmem>>, vector<1x32x256xf32>
    %1 = vector.shape_cast %0 : vector<1x32x256xf32> to vector<32x256xf32>
    %cst = arith.constant dense<0.000000e+00> : vector<32xf32>
    %2 = vector.multi_reduction <add>, %1, %cst [1] : vector<32x256xf32> to vector<32xf32>
    %3 = vector.shape_cast %2 : vector<32xf32> to vector<32x1xf32>
    %cst_2 = arith.constant 2.560000e+02 : f32
    %4 = vector.broadcast %cst_2 : f32 to vector<32x1xf32>
    %5 = arith.divf %3, %4 : vector<32x1xf32>
    %c0_3 = arith.constant 0 : index
    %c0_4 = arith.constant 0 : index
    %6 = vector.load %arg2[%c0_3, %c0_4] : memref<32x2xf32, #tpu.memory_space<vmem>>, vector<32x2xf32>
    %7 = vector.broadcast %5 : vector<32x1xf32> to vector<32x2xf32>
    %8 = arith.mulf %6, %7 : vector<32x2xf32>
    %cst_5 = arith.constant dense<0.000000e+00> : vector<2xf32>
    %9 = vector.multi_reduction <add>, %8, %cst_5 [0] : vector<32x2xf32> to vector<2xf32>
    %10 = vector.shape_cast %9 : vector<2xf32> to vector<1x2xf32>
    %c0_6 = arith.constant 0 : index
    %c0_7 = arith.constant 0 : index
    %11 = vector.load %arg3[%c0_6, %c0_7] : memref<1x2xf32, #tpu.memory_space<vmem>>, vector<1x2xf32>
    %12 = arith.addf %10, %11 : vector<1x2xf32>
    %cst_8 = arith.constant 0.000000e+00 : f32
    %13 = vector.broadcast %cst_8 : f32 to vector<1x2xf32>
    %14 = arith.maximumf %12, %13 : vector<1x2xf32>
    %c0_9 = arith.constant 0 : index
    %c0_10 = arith.constant 0 : index
    %15 = vector.load %arg4[%c0_9, %c0_10] : memref<32x2xf32, #tpu.memory_space<vmem>>, vector<32x2xf32>
    %16 = vector.broadcast %14 : vector<1x2xf32> to vector<32x2xf32>
    %17 = arith.mulf %15, %16 : vector<32x2xf32>
    %cst_11 = arith.constant dense<0.000000e+00> : vector<32xf32>
    %18 = vector.multi_reduction <add>, %17, %cst_11 [1] : vector<32x2xf32> to vector<32xf32>
    %19 = vector.shape_cast %18 : vector<32xf32> to vector<32x1xf32>
    %c0_12 = arith.constant 0 : index
    %c0_13 = arith.constant 0 : index
    %20 = vector.load %arg5[%c0_12, %c0_13] : memref<32x1xf32, #tpu.memory_space<vmem>>, vector<32x1xf32>
    %21 = arith.addf %19, %20 : vector<32x1xf32>
    %22 = arith.negf %21 : vector<32x1xf32>
    %23 = math.exp %22 : vector<32x1xf32>
    %cst_14 = arith.constant 1.000000e+00 : f32
    %24 = vector.broadcast %cst_14 : f32 to vector<32x1xf32>
    %25 = arith.addf %24, %23 : vector<32x1xf32>
    %26 = arith.divf %24, %25 : vector<32x1xf32>
    %c0_15 = arith.constant 0 : index
    %c0_16 = arith.constant 0 : index
    %27 = vector.load %arg6[%c0_15, %c0_16] : memref<1x32xf32, #tpu.memory_space<vmem>>, vector<1x32xf32>
    %cst_17 = arith.constant dense<0.000000e+00> : vector<1x256xf32>
    %28 = tpu.matmul %27, %1, %cst_17 {dimension_numbers = #tpu.dot_dimension_numbers<[1], [0], [0], [1], [0, 0, 1, 1], [], []>} : vector<1x32xf32>, vector<32x256xf32>, vector<1x256xf32> -> vector<1x256xf32>
    %29 = arith.negf %28 : vector<1x256xf32>
    %30 = math.exp %29 : vector<1x256xf32>
    %cst_18 = arith.constant 1.000000e+00 : f32
    %31 = vector.broadcast %cst_18 : f32 to vector<1x256xf32>
    %32 = arith.addf %31, %30 : vector<1x256xf32>
    %33 = arith.divf %31, %32 : vector<1x256xf32>
    %34 = vector.broadcast %26 : vector<32x1xf32> to vector<32x256xf32>
    %35 = vector.broadcast %33 : vector<1x256xf32> to vector<32x256xf32>
    %36 = arith.addf %34, %35 : vector<32x256xf32>
    %37 = arith.mulf %1, %36 : vector<32x256xf32>
    %c0_19 = arith.constant 0 : index
    %c0_20 = arith.constant 0 : index
    %c0_21 = arith.constant 0 : index
    %38 = vector.load %arg7[%c0_19, %c0_20, %c0_21] : memref<1x32x256xf32, #tpu.memory_space<vmem>>, vector<1x32x256xf32>
    %39 = vector.shape_cast %38 : vector<1x32x256xf32> to vector<32x256xf32>
    %40 = vector.shape_cast %37 : vector<32x256xf32> to vector<1x32x256xf32>
    tpu.vector_store %arg7[%c0_19, %c0_20, %c0_21], %40 {strides = array<i32>} : memref<1x32x256xf32, #tpu.memory_space<vmem>>, vector<1x32x256xf32>,
    return
  }
  func.func @transform_0(%arg0: i32) -> (i32, i32, i32) {
    %c0_i32 = arith.constant 0 : i32
    %c0_i32_0 = arith.constant 0 : i32
    %c0_i32_1 = arith.constant 0 : i32
    return %arg0, %c0_i32, %c0_i32_0 : i32, i32, i32
  }
  func.func @transform_1(%arg0: i32) -> (i32, i32) {
    %c0_i32 = arith.constant 0 : i32
    %c0_i32_0 = arith.constant 0 : i32
    %c0_i32_1 = arith.constant 0 : i32
    return %c0_i32, %c0_i32_0 : i32, i32
  }
  func.func @transform_2(%arg0: i32) -> (i32, i32) {
    %c0_i32 = arith.constant 0 : i32
    %c0_i32_0 = arith.constant 0 : i32
    %c0_i32_1 = arith.constant 0 : i32
    return %c0_i32, %c0_i32_0 : i32, i32
  }
  func.func @transform_3(%arg0: i32) -> (i32, i32) {
    %c0_i32 = arith.constant 0 : i32
    %c0_i32_0 = arith.constant 0 : i32
    %c0_i32_1 = arith.constant 0 : i32
    return %c0_i32, %c0_i32_0 : i32, i32
  }
  func.func @transform_4(%arg0: i32) -> (i32, i32) {
    %c0_i32 = arith.constant 0 : i32
    %c0_i32_0 = arith.constant 0 : i32
    %c0_i32_1 = arith.constant 0 : i32
    return %c0_i32, %c0_i32_0 : i32, i32
  }
  func.func @transform_5(%arg0: i32) -> (i32, i32) {
    %c0_i32 = arith.constant 0 : i32
    %c0_i32_0 = arith.constant 0 : i32
    %c0_i32_1 = arith.constant 0 : i32
    return %c0_i32, %c0_i32_0 : i32, i32
  }
  func.func @transform_6(%arg0: i32) -> (i32, i32, i32) {
    %c0_i32 = arith.constant 0 : i32
    %c0_i32_0 = arith.constant 0 : i32
    %c0_i32_1 = arith.constant 0 : i32
    return %arg0, %c0_i32, %c0_i32_0 : i32, i32, i32
  }
}

</mosaic_0001>

<llo_original>
// kernel: scse_forward.1
$region0: #{scse_forward.1}
  #allocation0 [shape = 'u32[]', space=smem, size = 0x4, offset = 0x4, fixed_abs, tag = 'smem constant byte address 0x4 - core index']
  #allocation1 [shape = 'u32[72,128]{1,0:T(1,128)}', space=vmem, size = 0x9000, scoped, tag = 'internal scratch']
  %s0 = inlined_call_operand.vmem [shape: f32[2,32,256], index: 0, kind: input, shape index: {}]
  %s1 = inlined_call_operand.vmem [shape: f32[32,2], index: 1, kind: input, shape index: {}]
  %s2 = inlined_call_operand.vmem [shape: f32[1,2], index: 2, kind: input, shape index: {}]
  %s3 = inlined_call_operand.vmem [shape: f32[32,2], index: 3, kind: input, shape index: {}]
  %s4 = inlined_call_operand.vmem [shape: f32[32,1], index: 4, kind: input, shape index: {}]
  %s5 = inlined_call_operand.vmem [shape: f32[1,32], index: 5, kind: input, shape index: {}]
  %s6 = inlined_call_operand.vmem [shape: f32[2,32,256], index: 6, kind: output, shape index: {}]
  %s7 = sld [smem:[#allocation0]]
  $region57: #{scse_forward.1} parent=0
    _
  %s9 = ssub.s32 1, %s7
  %s10 = scalar_select 0, %s9, %s7
  loop: start=0, step=1, limit=4
  $region2: #{scse_forward.1} parent=0 // loop_pre_header
    _
  $region3: #{scse_forward.1} parent=0 // loop_header
    %s12 = sphi 0, %s16
    %p13 = scmp.ge.s32.totalorder %s12, 4
    %s22 = sphi 0, %s24
    %s25 = sphi 0, %s22
    %s26 = sphi 0, %s25
    %s42 = sphi 0, %s26
    %s46 = sphi 0, %s46
    %s48 = sphi 0, %s46
    %s49 = sphi 0, %s48
    %s63 = sphi 0, %s49
    %s67 = sphi 0, %s67
    %s69 = sphi 0, %s67
    %s70 = sphi 0, %s69
    %s84 = sphi 0, %s70
    %s88 = sphi 0, %s88
    %s90 = sphi 0, %s88
    %s91 = sphi 0, %s90
    %s105 = sphi 0, %s91
    %s109 = sphi 0, %s109
    %s111 = sphi 0, %s109
    %s112 = sphi 0, %s111
    %s126 = sphi 0, %s112
    %s130 = sphi 0, %s130
    %s132 = sphi 0, %s130
    %s133 = sphi 0, %s132
    %s147 = sphi 0, %s133
    %s153 = sphi 0, %s155
    %s156 = sphi 0, %s153
    %s157 = sphi 0, %s156
    %s173 = sphi 0, %s157
  $region4: #{scse_forward.1} parent=0 // loop_header_branch
    %15 = sbr.rel (%p13) target = $region8
  $region5: #{scse_forward.1} parent=0 // loop_body
    %s17 = ssub.s32 %s12, 1
    %s18 = ssub.s32 %s12, 2
    %s19 = sadd.s32 %s12, 1
    %s20 = ssub.s32 %s12, %s19
    %p21 = scmp.eq.s32.totalorder %s20, 0
    %s23 = sadd.s32 %s22, 1
    %s24 = scalar_select %p21, %s22, %s23
    %p27 = pneg %p21
    %p28 = scmp.eq.s32.totalorder %s12, 1
    %p29 = por %p27, %p28
    %p30 = scmp.ne.s32.totalorder %s22, %s25
    %p31 = scmp.eq.s32.totalorder %s12, 0
    %p32 = por %p30, %p31
    %p33 = scmp.ne.s32.totalorder %s22, %s25
    %p34 = scmp.eq.s32.totalorder %s17, 1
    %p35 = por %p33, %p34
    %p36 = scmp.ne.s32.totalorder %s25, %s26
    %p37 = scmp.eq.s32.totalorder %s17, 0
    %p38 = por %p36, %p37
    %p39 = scmp.ne.s32.totalorder %s25, %s26
    %p40 = scmp.eq.s32.totalorder %s18, 1
    %p41 = por %p39, %p40
    %p43 = scmp.ne.s32.totalorder %s26, %s42
    %p44 = scmp.eq.s32.totalorder %s18, 0
    %p45 = por %p43, %p44
    %s47 = sadd.s32 %s46, 1
    %p50 = scmp.eq.s32.totalorder %s12, 1
    %p51 = scmp.ne.s32.totalorder %s46, %s48
    %p52 = scmp.eq.s32.totalorder %s12, 0
    %p53 = por %p51, %p52
    %p54 = scmp.ne.s32.totalorder %s46, %s48
    %p55 = scmp.eq.s32.totalorder %s17, 1
    %p56 = por %p54, %p55
    %p57 = scmp.ne.s32.totalorder %s48, %s49
    %p58 = scmp.eq.s32.totalorder %s17, 0
    %p59 = por %p57, %p58
    %p60 = scmp.ne.s32.totalorder %s48, %s49
    %p61 = scmp.eq.s32.totalorder %s18, 1
    %p62 = por %p60, %p61
    %p64 = scmp.ne.s32.totalorder %s49, %s63
    %p65 = scmp.eq.s32.totalorder %s18, 0
    %p66 = por %p64, %p65
    %s68 = sadd.s32 %s67, 1
    %p71 = scmp.eq.s32.totalorder %s12, 1
    %p72 = scmp.ne.s32.totalorder %s67, %s69
    %p73 = scmp.eq.s32.totalorder %s12, 0
    %p74 = por %p72, %p73
    %p75 = scmp.ne.s32.totalorder %s67, %s69
    %p76 = scmp.eq.s32.totalorder %s17, 1
    %p77 = por %p75, %p76
    %p78 = scmp.ne.s32.totalorder %s69, %s70
    %p79 = scmp.eq.s32.totalorder %s17, 0
    %p80 = por %p78, %p79
    %p81 = scmp.ne.s32.totalorder %s69, %s70
    %p82 = scmp.eq.s32.totalorder %s18, 1
    %p83 = por %p81, %p82
    %p85 = scmp.ne.s32.totalorder %s70, %s84
    %p86 = scmp.eq.s32.totalorder %s18, 0
    %p87 = por %p85, %p86
    %s89 = sadd.s32 %s88, 1
    %p92 = scmp.eq.s32.totalorder %s12, 1
    %p93 = scmp.ne.s32.totalorder %s88, %s90
    %p94 = scmp.eq.s32.totalorder %s12, 0
    %p95 = por %p93, %p94
    %p96 = scmp.ne.s32.totalorder %s88, %s90
    %p97 = scmp.eq.s32.totalorder %s17, 1
    %p98 = por %p96, %p97
    %p99 = scmp.ne.s32.totalorder %s90, %s91
    %p100 = scmp.eq.s32.totalorder %s17, 0
    %p101 = por %p99, %p100
    %p102 = scmp.ne.s32.totalorder %s90, %s91
    %p103 = scmp.eq.s32.totalorder %s18, 1
    %p104 = por %p102, %p103
    %p106 = scmp.ne.s32.totalorder %s91, %s105
    %p107 = scmp.eq.s32.totalorder %s18, 0
    %p108 = por %p106, %p107
    %s110 = sadd.s32 %s109, 1
    %p113 = scmp.eq.s32.totalorder %s12, 1
    %p114 = scmp.ne.s32.totalorder %s109, %s111
    %p115 = scmp.eq.s32.totalorder %s12, 0
    %p116 = por %p114, %p115
    %p117 = scmp.ne.s32.totalorder %s109, %s111
    %p118 = scmp.eq.s32.totalorder %s17, 1
    %p119 = por %p117, %p118
    %p120 = scmp.ne.s32.totalorder %s111, %s112
    %p121 = scmp.eq.s32.totalorder %s17, 0
    %p122 = por %p120, %p121
    %p123 = scmp.ne.s32.totalorder %s111, %s112
    %p124 = scmp.eq.s32.totalorder %s18, 1
    %p125 = por %p123, %p124
    %p127 = scmp.ne.s32.totalorder %s112, %s126
    %p128 = scmp.eq.s32.totalorder %s18, 0
    %p129 = por %p127, %p128
    %s131 = sadd.s32 %s130, 1
    %p134 = scmp.eq.s32.totalorder %s12, 1
    %p135 = scmp.ne.s32.totalorder %s130, %s132
    %p136 = scmp.eq.s32.totalorder %s12, 0
    %p137 = por %p135, %p136
    %p138 = scmp.ne.s32.totalorder %s130, %s132
    %p139 = scmp.eq.s32.totalorder %s17, 1
    %p140 = por %p138, %p139
    %p141 = scmp.ne.s32.totalorder %s132, %s133
    %p142 = scmp.eq.s32.totalorder %s17, 0
    %p143 = por %p141, %p142
    %p144 = scmp.ne.s32.totalorder %s132, %s133
    %p145 = scmp.eq.s32.totalorder %s18, 1
    %p146 = por %p144, %p145
    %p148 = scmp.ne.s32.totalorder %s133, %s147
    %p149 = scmp.eq.s32.totalorder %s18, 0
    %p150 = por %p148, %p149
    %s151 = ssub.s32 %s12, %s19
    %p152 = scmp.eq.s32.totalorder %s151, 0
    %s154 = sadd.s32 %s153, 1
    %s155 = scalar_select %p152, %s153, %s154
    %p158 = pneg %p152
    %p159 = scmp.eq.s32.totalorder %s12, 1
    %p160 = por %p158, %p159
    %p161 = scmp.ne.s32.totalorder %s153, %s156
    %p162 = scmp.eq.s32.totalorder %s12, 0
    %p163 = por %p161, %p162
    %p164 = scmp.ne.s32.totalorder %s153, %s156
    %p165 = scmp.eq.s32.totalorder %s17, 1
    %p166 = por %p164, %p165
    %p167 = scmp.ne.s32.totalorder %s156, %s157
    %p168 = scmp.eq.s32.totalorder %s17, 0
    %p169 = por %p167, %p168
    %p170 = scmp.ne.s32.totalorder %s156, %s157
    %p171 = scmp.eq.s32.totalorder %s18, 1
    %p172 = por %p170, %p171
    %p174 = scmp.ne.s32.totalorder %s157, %s173
    %p175 = scmp.eq.s32.totalorder %s18, 0
    %p176 = por %p174, %p175
    %p177 = scmp.le.s32.totalorder 1, %s12
    %p178 = scmp.lt.s32.totalorder %s12, 3
    %p179 = pnand %p177, %p178
    %p180 = pneg %p179
    // Predicated region
    $region9: #{scse_forward.1} parent=5 // pred_check
      _
    $region10: #{scse_forward.1} parent=5 // pred_check_branch
      %182 = sbr.rel (%p179) target = $region12
    $region11: #{scse_forward.1} parent=5 // pred_region
      %s183 = ssub.s32 %s12, 1
      // Predicated region
      $region13: #{scse_forward.1} parent=11 // pred_check
        %p184 = pneg %p59
      $region14: #{scse_forward.1} parent=11 // pred_check_branch
        %186 = sbr.rel (%p184) target = $region16
      $region15: #{scse_forward.1} parent=11 // pred_region
        _
      $region16: #{scse_forward.1} parent=11 // pred_fallthru
        _
      // Predicated region
      $region17: #{scse_forward.1} parent=11 // pred_check
        %p187 = pneg %p80
      $region18: #{scse_forward.1} parent=11 // pred_check_branch
        %189 = sbr.rel (%p187) target = $region20
      $region19: #{scse_forward.1} parent=11 // pred_region
        _
      $region20: #{scse_forward.1} parent=11 // pred_fallthru
        _
      // Predicated region
      $region21: #{scse_forward.1} parent=11 // pred_check
        %p190 = pneg %p101
      $region22: #{scse_forward.1} parent=11 // pred_check_branch
        %192 = sbr.rel (%p190) target = $region24
      $region23: #{scse_forward.1} parent=11 // pred_region
        _
      $region24: #{scse_forward.1} parent=11 // pred_fallthru
        _
      // Predicated region
      $region25: #{scse_forward.1} parent=11 // pred_check
        %p193 = pneg %p122
      $region26: #{scse_forward.1} parent=11 // pred_check_branch
        %195 = sbr.rel (%p193) target = $region28
      $region27: #{scse_forward.1} parent=11 // pred_region
        _
      $region28: #{scse_forward.1} parent=11 // pred_fallthru
        _
      // Predicated region
      $region29: #{scse_forward.1} parent=11 // pred_check
        %p196 = pneg %p143
      $region30: #{scse_forward.1} parent=11 // pred_check_branch
        %198 = sbr.rel (%p196) target = $region32
      $region31: #{scse_forward.1} parent=11 // pred_region
        _
      $region32: #{scse_forward.1} parent=11 // pred_fallthru
        _
    $region12: #{scse_forward.1} parent=5 // pred_fallthru
      _
    %p199 = scmp.lt.s32.totalorder %s12, 2
    // Predicated region
    $region33: #{scse_forward.1} parent=5 // pred_check
      %p200 = pneg %p199
    $region34: #{scse_forward.1} parent=5 // pred_check_branch
      %202 = sbr.rel (%p200) target = $region36
    $region35: #{scse_forward.1} parent=5 // pred_region
      // Predicated region
      $region37: #{scse_forward.1} parent=35 // pred_check
        %p203 = pneg %p32
      $region38: #{scse_forward.1} parent=35 // pred_check_branch
        %205 = sbr.rel (%p203) target = $region40
      $region39: #{scse_forward.1} parent=35 // pred_region
        %p206 = scmp.lt.s32.totalorder %s12, 1
        %s207 = scalar_select %p206, %s12, 1
        %s208 = smul.addr %s207, 8
        %s209 = smul.addr %s208, 8
        %s210 = scalar_lea.vmem %s0, %s209
      $region40: #{scse_forward.1} parent=35 // pred_fallthru
        _
    $region36: #{scse_forward.1} parent=5 // pred_fallthru
      _
    %p211 = scmp.le.s32.totalorder 1, %s12
    %p212 = scmp.lt.s32.totalorder %s12, 3
    %p213 = pnand %p211, %p212
    %p214 = pneg %p213
    // Predicated region
    $region41: #{scse_forward.1} parent=5 // pred_check
      _
    $region42: #{scse_forward.1} parent=5 // pred_check_branch
      %216 = sbr.rel (%p213) target = $region44
    $region43: #{scse_forward.1} parent=5 // pred_region
      %s217 = ssub.s32 %s12, 1
      %p218 = scmp.lt.s32.totalorder %s17, 1
      %s219 = scalar_select %p218, %s17, 1
      %s220 = smul.addr %s219, 8
      %s221 = smul.addr %s220, 8
      %s222 = scalar_lea.vmem %s0, %s221
      %p223 = pneg %p38
      %p224 = pneg %p35
      %p225 = pneg %p59
      %p226 = pneg %p56
      %p227 = pneg %p80
      %p228 = pneg %p77
      %p229 = pneg %p101
      %p230 = pneg %p98
      %p231 = pneg %p122
      %p232 = pneg %p119
      %p233 = pneg %p143
      %p234 = pneg %p140
      %p235 = pneg %p169
      %p236 = pneg %p166
      %p237 = scmp.lt.s32.totalorder %s17, 1
      %s238 = scalar_select %p237, %s17, 1
      %s239 = smul.addr %s238, 8
      %s240 = smul.addr %s239, 8
      %s241 = scalar_lea.vmem %s6, %s240
      %p242 = scmp.lt.s32.totalorder %s17, 1
      %s243 = scalar_select %p242, %s17, 1
      %s244 = smul.addr %s243, 8
      %s245 = smul.addr %s244, 8
      %s246 = scalar_lea.vmem %s0, %s245
      %p247 = scmp.lt.s32.totalorder %s17, 1
      %s248 = scalar_select %p247, %s17, 1
      %s249 = smul.addr %s248, 8
      %s250 = smul.addr %s249, 8
      %s251 = scalar_lea.vmem %s6, %s250
      %v252 = vld [vmem:[%s246] sm:$0xff]
      %v253 = vld [vmem:[%s246 + $0x8] sm:$0xff]
      %v254 = vld [vmem:[%s246 + $0x10] sm:$0xff]
      %v255 = vld [vmem:[%s246 + $0x18] sm:$0xff]
      %v256 = vld [vmem:[%s246 + $0x20] sm:$0xff]
      %v257 = vld [vmem:[%s246 + $0x28] sm:$0xff]
      %v258 = vld [vmem:[%s246 + $0x30] sm:$0xff]
      %v259 = vld [vmem:[%s246 + $0x38] sm:$0xff]
      %v260 = vadd.f32 %v252, %v253
      %261 = vadd.xlane.f32.xlu0 %v260
      %v262 = vpop.xlane.xlu0 %261
      %v263 = vadd.f32 %v254, %v255
      %264 = vadd.xlane.f32.xlu0 %v263
      %v265 = vpop.xlane.xlu0 %264
      %v266 = vadd.f32 %v256, %v257
      %267 = vadd.xlane.f32.xlu0 %v266
      %v268 = vpop.xlane.xlu0 %267
      %v269 = vadd.f32 %v258, %v259
      %270 = vadd.xlane.f32.xlu0 %v269
      %v271 = vpop.xlane.xlu0 %270
      %v272 = vrcp.pop 256.0
      %v273 = vmul.f32 256.0, %v272
      %v274 = vsub.f32 1.0, %v273
      %v275 = vmul.f32 %v272, %v274
      %v276 = vadd.f32 %v272, %v275
      %vm277 = vweird.f32 %v272
      %v278 = vsel %vm277, %v272, %v276
      %v279 = vmul.f32 %v262, %v278
      %v280 = vmul.f32 %v265, %v278
      %v281 = vmul.f32 %v268, %v278
      %v282 = vmul.f32 %v271, %v278
      %v283 = vld [vmem:[%s1] sm:$0xff]
      %v284 = vld [vmem:[%s1 + $0x8] sm:$0xff]
      %v285 = vld [vmem:[%s1 + $0x10] sm:$0xff]
      %v286 = vld [vmem:[%s1 + $0x18] sm:$0xff]
      %v287 = vmul.f32 %v283, %v279
      %v288 = vmul.f32 %v284, %v280
      %v289 = vmul.f32 %v285, %v281
      %v290 = vmul.f32 %v286, %v282
      %vm291 = vcmask 15360
      %v292 = vsel %vm291, %v287, 0.0
      %v293 = vsel %vm291, %v288, 0.0
      %v294 = vadd.f32 %v292, %v293
      %v295 = vsel %vm291, %v289, 0.0
      %v296 = vadd.f32 %v294, %v295
      %v297 = vsel %vm291, %v290, 0.0
      %v298 = vadd.f32 %v296, %v297
      %v299 = vrot.slane %v298, 4
      %v300 = vadd.f32 %v298, %v299
      %v301 = vrot.slane %v300, 2
      %v302 = vadd.f32 %v300, %v301
      %v303 = vrot.slane %v302, 1
      %v304 = vadd.f32 %v302, %v303
      %v305 = vld [vmem:[%s2] sm:$0x1]
      %v306 = vadd.f32 %v304, %v305
      %v307 = vmax.f32 %v306, 0.0
      %v308 = vld [vmem:[%s3] sm:$0xff]
      %v309 = vld [vmem:[%s3 + $0x8] sm:$0xff]
      %v310 = vld [vmem:[%s3 + $0x10] sm:$0xff]
      %v311 = vld [vmem:[%s3 + $0x18] sm:$0xff]
      %v312 = vperm.slane %v307, 0
      %v313 = vmul.f32 %v308, %v312
      %v314 = vmul.f32 %v309, %v312
      %v315 = vmul.f32 %v310, %v312
      %v316 = vmul.f32 %v311, %v312
      %v317 = vsel %vm291, %v313, 0.0
      %318 = vadd.xlane.f32.xlu0 %v317
      %v319 = vpop.xlane.xlu0 %318
      %v320 = vsel %vm291, %v314, 0.0
      %321 = vadd.xlane.f32.xlu0 %v320
      %v322 = vpop.xlane.xlu0 %321
      %v323 = vsel %vm291, %v315, 0.0
      %324 = vadd.xlane.f32.xlu0 %v323
      %v325 = vpop.xlane.xlu0 %324
      %v326 = vsel %vm291, %v316, 0.0
      %327 = vadd.xlane.f32.xlu0 %v326
      %v328 = vpop.xlane.xlu0 %327
      %v329 = vld [vmem:[%s4] sm:$0xff]
      %v330 = vld [vmem:[%s4 + $0x8] sm:$0xff]
      %v331 = vld [vmem:[%s4 + $0x10] sm:$0xff]
      %v332 = vld [vmem:[%s4 + $0x18] sm:$0xff]
      %v333 = vadd.f32 %v319, %v329
      %v334 = vadd.f32 %v322, %v330
      %v335 = vadd.f32 %v325, %v331
      %v336 = vadd.f32 %v328, %v332
      %v337 = vxor.u32 %v333, 2147483648
      %v338 = vxor.u32 %v334, 2147483648
      %v339 = vxor.u32 %v335, 2147483648
      %v340 = vxor.u32 %v336, 2147483648
      %v341 = vmul.f32 %v337, 1.442695
      %v342 = vpow.pop %v341
      %v343 = vmul.f32 %v338, 1.442695
      %v344 = vpow.pop %v343
      %v345 = vmul.f32 %v339, 1.442695
      %v346 = vpow.pop %v345
      %v347 = vmul.f32 %v340, 1.442695
      %v348 = vpow.pop %v347
      %v349 = vadd.f32 %v342, 1.0
      %v350 = vadd.f32 %v344, 1.0
      %v351 = vadd.f32 %v346, 1.0
      %v352 = vadd.f32 %v348, 1.0
      %v353 = vrcp.pop %v349
      %v354 = vmul.f32 %v349, %v353
      %v355 = vsub.f32 1.0, %v354
      %v356 = vmul.f32 %v353, %v355
      %v357 = vadd.f32 %v353, %v356
      %vm358 = vweird.f32 %v349
      %vm359 = vweird.f32 %v353
      %vm360 = vmor %vm358, %vm359
      %v361 = vsel %vm360, %v353, %v357
      %v362 = vand.u32 2147483647, %v349
      %vm363 = vcmp.eq.f32.partialorder %v362, 8.507059e+37
      %v364 = vand.u32 %v349, 2147483648
      %v365 = vor.u32 1.1754944e-38, %v364
      %v366 = vsel %vm363, %v365, %v361
      %v367 = vmul.f32 1.0, %v366
      %v368 = vrcp.pop %v350
      %v369 = vmul.f32 %v350, %v368
      %v370 = vsub.f32 1.0, %v369
      %v371 = vmul.f32 %v368, %v370
      %v372 = vadd.f32 %v368, %v371
      %vm373 = vweird.f32 %v350
      %vm374 = vweird.f32 %v368
      %vm375 = vmor %vm373, %vm374
      %v376 = vsel %vm375, %v368, %v372
      %v377 = vand.u32 2147483647, %v350
      %vm378 = vcmp.eq.f32.partialorder %v377, 8.507059e+37
      %v379 = vand.u32 %v350, 2147483648
      %v380 = vor.u32 1.1754944e-38, %v379
      %v381 = vsel %vm378, %v380, %v376
      %v382 = vmul.f32 1.0, %v381
      %v383 = vrcp.pop %v351
      %v384 = vmul.f32 %v351, %v383
      %v385 = vsub.f32 1.0, %v384
      %v386 = vmul.f32 %v383, %v385
      %v387 = vadd.f32 %v383, %v386
      %vm388 = vweird.f32 %v351
      %vm389 = vweird.f32 %v383
      %vm390 = vmor %vm388, %vm389
      %v391 = vsel %vm390, %v383, %v387
      %v392 = vand.u32 2147483647, %v351
      %vm393 = vcmp.eq.f32.partialorder %v392, 8.507059e+37
      %v394 = vand.u32 %v351, 2147483648
      %v395 = vor.u32 1.1754944e-38, %v394
      %v396 = vsel %vm393, %v395, %v391
      %v397 = vmul.f32 1.0, %v396
      %v398 = vrcp.pop %v352
      %v399 = vmul.f32 %v352, %v398
      %v400 = vsub.f32 1.0, %v399
      %v401 = vmul.f32 %v398, %v400
      %v402 = vadd.f32 %v398, %v401
      %vm403 = vweird.f32 %v352
      %vm404 = vweird.f32 %v398
      %vm405 = vmor %vm403, %vm404
      %v406 = vsel %vm405, %v398, %v402
      %v407 = vand.u32 2147483647, %v352
      %vm408 = vcmp.eq.f32.partialorder %v407, 8.507059e+37
      %v409 = vand.u32 %v352, 2147483648
      %v410 = vor.u32 1.1754944e-38, %v409
      %v411 = vsel %vm408, %v410, %v406
      %v412 = vmul.f32 1.0, %v411
      %v413 = vld [vmem:[%s5] sm:$0x1]
      %vm414 = vcmask 261120
      %v416 = vsel %vm414, %v413, 0
      %418 = vmatpush.msra.mxu0 0.0
      %419 = vmatpush.msra.mxu0 0.0
      %420 = vmatpush.msra.mxu0 0.0
      %421 = vmatpush.msra.mxu0 0.0
      %422 = vmatpush.msra.mxu0 0.0
      %423 = vmatpush.msra.mxu0 0.0
      %424 = vmatpush.msra.mxu0 0.0
      %425 = vmatpush.msra.mxu0 0.0
      %426 = vmatpush.msra.mxu0 0.0
      %427 = vmatpush.msra.mxu0 0.0
      %428 = vmatpush.msra.mxu0 0.0
      %429 = vmatpush.msra.mxu0 0.0
      %430 = vmatpush.msra.mxu0 %v258
      %431 = vmatpush.msra.mxu0 %v256
      %432 = vmatpush.msra.mxu0 %v254
      %433 = vmatpush.msra.mxu0 %v252
      %434 = vmatmul.f32.gmra.mxu0 %v416
      %v435 = vpop.f32.mrf.mxu0
      %v436 = vadd.f32 0.0, %v435
      %437 = vdwg.mxu0
      %438 = vmatpush.msra.mxu0 0.0
      %439 = vmatpush.msra.mxu0 0.0
      %440 = vmatpush.msra.mxu0 0.0
      %441 = vmatpush.msra.mxu0 0.0
      %442 = vmatpush.msra.mxu0 0.0
      %443 = vmatpush.msra.mxu0 0.0
      %444 = vmatpush.msra.mxu0 0.0
      %445 = vmatpush.msra.mxu0 0.0
      %446 = vmatpush.msra.mxu0 0.0
      %447 = vmatpush.msra.mxu0 0.0
      %448 = vmatpush.msra.mxu0 0.0
      %449 = vmatpush.msra.mxu0 0.0
      %450 = vmatpush.msra.mxu0 %v259
      %451 = vmatpush.msra.mxu0 %v257
      %452 = vmatpush.msra.mxu0 %v255
      %453 = vmatpush.msra.mxu0 %v253
      %454 = vmatmul.f32.gmra.mxu0 %v416
      %v455 = vpop.f32.mrf.mxu0
      %v456 = vadd.f32 0.0, %v455
      %457 = vdwg.mxu0
      %v458 = vxor.u32 %v436, 2147483648
      %v459 = vxor.u32 %v456, 2147483648
      %v460 = vmul.f32 %v458, 1.442695
      %v461 = vpow.pop %v460
      %v462 = vmul.f32 %v459, 1.442695
      %v463 = vpow.pop %v462
      %v464 = vadd.f32 %v461, 1.0
      %v465 = vadd.f32 %v463, 1.0
      %v466 = vrcp.pop %v464
      %v467 = vmul.f32 %v464, %v466
      %v468 = vsub.f32 1.0, %v467
      %v469 = vmul.f32 %v466, %v468
      %v470 = vadd.f32 %v466, %v469
      %vm471 = vweird.f32 %v464
      %vm472 = vweird.f32 %v466
      %vm473 = vmor %vm471, %vm472
      %v474 = vsel %vm473, %v466, %v470
      %v475 = vand.u32 2147483647, %v464
      %vm476 = vcmp.eq.f32.partialorder %v475, 8.507059e+37
      %v477 = vand.u32 %v464, 2147483648
      %v478 = vor.u32 1.1754944e-38, %v477
      %v479 = vsel %vm476, %v478, %v474
      %v480 = vmul.f32 1.0, %v479
      %v481 = vrcp.pop %v465
      %v482 = vmul.f32 %v465, %v481
      %v483 = vsub.f32 1.0, %v482
      %v484 = vmul.f32 %v481, %v483
      %v485 = vadd.f32 %v481, %v484
      %vm486 = vweird.f32 %v465
      %vm487 = vweird.f32 %v481
      %vm488 = vmor %vm486, %vm487
      %v489 = vsel %vm488, %v481, %v485
      %v490 = vand.u32 2147483647, %v465
      %vm491 = vcmp.eq.f32.partialorder %v490, 8.507059e+37
      %v492 = vand.u32 %v465, 2147483648
      %v493 = vor.u32 1.1754944e-38, %v492
      %v494 = vsel %vm491, %v493, %v489
      %v495 = vmul.f32 1.0, %v494
      %497 = vset.pattern.permute.xlu0 0
      %498 = vperm.xlu0 %497, %v367
      %v499 = vpop.permute.xlu0 %498
      %502 = vset.pattern.permute.xlu0 0
      %503 = vperm.xlu0 %502, %v382
      %v504 = vpop.permute.xlu0 %503
      %507 = vset.pattern.permute.xlu0 0
      %508 = vperm.xlu0 %507, %v397
      %v509 = vpop.permute.xlu0 %508
      %512 = vset.pattern.permute.xlu0 0
      %513 = vperm.xlu0 %512, %v412
      %v514 = vpop.permute.xlu0 %513
      %v516 = vperm.slane %v480, 0
      %v517 = vperm.slane %v495, 0
      %v518 = vadd.f32 %v499, %v516
      %v519 = vadd.f32 %v499, %v517
      %v520 = vadd.f32 %v504, %v516
      %v521 = vadd.f32 %v504, %v517
      %v522 = vadd.f32 %v509, %v516
      %v523 = vadd.f32 %v509, %v517
      %v524 = vadd.f32 %v514, %v516
      %v525 = vadd.f32 %v514, %v517
      %v526 = vmul.f32 %v252, %v518
      %v527 = vmul.f32 %v253, %v519
      %v528 = vmul.f32 %v254, %v520
      %v529 = vmul.f32 %v255, %v521
      %v530 = vmul.f32 %v256, %v522
      %v531 = vmul.f32 %v257, %v523
      %v532 = vmul.f32 %v258, %v524
      %v533 = vmul.f32 %v259, %v525
      %534 = vst [vmem:[%s251] sm:$0xff] %v526
      %535 = vst [vmem:[%s251 + $0x8] sm:$0xff] %v527
      %536 = vst [vmem:[%s251 + $0x10] sm:$0xff] %v528
      %537 = vst [vmem:[%s251 + $0x18] sm:$0xff] %v529
      %538 = vst [vmem:[%s251 + $0x20] sm:$0xff] %v530
      %539 = vst [vmem:[%s251 + $0x28] sm:$0xff] %v531
      %540 = vst [vmem:[%s251 + $0x30] sm:$0xff] %v532
      %541 = vst [vmem:[%s251 + $0x38] sm:$0xff] %v533
      %p542 = scmp.lt.s32.totalorder %s17, 1
      %s543 = scalar_select %p542, %s17, 1
      %s544 = smul.addr %s543, 8
      %s545 = smul.addr %s544, 8
      %s546 = scalar_lea.vmem %s6, %s545
      // Predicated region
      $region45: #{scse_forward.1} parent=43 // pred_check
        %p547 = pneg %p166
      $region46: #{scse_forward.1} parent=43 // pred_check_branch
        %549 = sbr.rel (%p547) target = $region48
      $region47: #{scse_forward.1} parent=43 // pred_region
        _
      $region48: #{scse_forward.1} parent=43 // pred_fallthru
        _
    $region44: #{scse_forward.1} parent=5 // pred_fallthru
      _
    %p550 = scmp.le.s32.totalorder 2, %s12
    // Predicated region
    $region49: #{scse_forward.1} parent=5 // pred_check
      %p551 = pneg %p550
    $region50: #{scse_forward.1} parent=5 // pred_check_branch
      %553 = sbr.rel (%p551) target = $region52
    $region51: #{scse_forward.1} parent=5 // pred_region
      %s554 = ssub.s32 %s12, 2
      // Predicated region
      $region53: #{scse_forward.1} parent=51 // pred_check
        %p555 = pneg %p172
      $region54: #{scse_forward.1} parent=51 // pred_check_branch
        %557 = sbr.rel (%p555) target = $region56
      $region55: #{scse_forward.1} parent=51 // pred_region
        %p558 = scmp.lt.s32.totalorder %s18, 1
        %s559 = scalar_select %p558, %s18, 1
        %s560 = smul.addr %s559, 8
        %s561 = smul.addr %s560, 8
        %s562 = scalar_lea.vmem %s6, %s561
      $region56: #{scse_forward.1} parent=51 // pred_fallthru
        _
    $region52: #{scse_forward.1} parent=5 // pred_fallthru
      _
  $region6: #{scse_forward.1} parent=0 // loop_footer
    %s16 = sadd.s32 1, %s12
  $region7: #{scse_forward.1} parent=0 // loop_footer_branch
    %11 = sbr.rel target = $region3
  $region8: #{scse_forward.1} parent=0 // loop_exit
    _

</llo_original>
